<compile_context>
chip_gen: v7x
topology: tpu7x:2x2x1
jax: 0.10.0
libtpu: 0.0.40
codegen_flags: <defaults>
</compile_context>

<pallas_src>
import functools

import jax
import jax.numpy as jnp
from jax.experimental import pallas as pl
from jax.experimental.pallas import tpu as pltpu


def _ln_affine_kernel(x_ref, gamma_ref, beta_ref, o_ref, *, eps, inv_n, inv_nm1):
    # x_ref: (B, SUB, LANE) tile holding B whole samples.
    x = x_ref[...]
    xf = x.astype(jnp.float32)

    # Fused one-sweep reduction: sum and sum-of-squares (f32 accumulation).
    s = jnp.sum(xf, axis=(1, 2), keepdims=True)          # (B, 1, 1)
    ss = jnp.sum(xf * xf, axis=(1, 2), keepdims=True)    # (B, 1, 1)
    mean = s * inv_n
    var = (ss - mean * s) * inv_nm1                      # unbiased (ddof=1)
    std = jnp.sqrt(var)

    denom = std + eps
    inv = pl.reciprocal(denom, approx=True)              # EUP slot
    inv = inv * (2.0 - denom * inv)                      # Newton step -> full f32

    # Fold everything into one FMA per element: y = x*scale + shift.
    scale = gamma_ref[...].astype(jnp.float32) * inv     # (B, SUB, LANE)
    shift = beta_ref[...].astype(jnp.float32) - mean * scale
    o_ref[...] = (xf * scale + shift).astype(o_ref.dtype)


def _ln_noaffine_kernel(x_ref, o_ref, *, eps, inv_n, inv_nm1):
    x = x_ref[...]
    xf = x.astype(jnp.float32)
    s = jnp.sum(xf, axis=(1, 2), keepdims=True)
    ss = jnp.sum(xf * xf, axis=(1, 2), keepdims=True)
    mean = s * inv_n
    var = (ss - mean * s) * inv_nm1
    std = jnp.sqrt(var)
    denom = std + eps
    inv = pl.reciprocal(denom, approx=True)
    inv = inv * (2.0 - denom * inv)
    o_ref[...] = ((xf - mean) * inv).astype(o_ref.dtype)


def _factor_lanes(d):
    """Factor D into (SUB, LANE) with LANE lane-dense when possible."""
    if d % 128 == 0:
        return d // 128, 128
    return 1, d


def _pick_block_batch(n, d):
    """Samples per grid step: ~1 MiB f32 working set, keep >=2 grid steps."""
    target_bytes = 1 << 20
    cap = max(1, target_bytes // max(1, d * 4))
    if n >= 2:
        cap = min(cap, n // 2)        # leave >=2 iterations for 2-TC chips
    cap = max(1, min(cap, n))
    best = 1
    for cand in range(1, cap + 1):
        if n % cand == 0:
            best = cand
    return best


def layer_norm(x, gamma=None, beta=None, *, eps=1e-5, affine=True):
    """x: (N, C, ...) any rank >= 2; gamma, beta: (C,)."""
    orig_shape = x.shape
    n = orig_shape[0]
    c = orig_shape[1]
    d = 1
    for s in orig_shape[1:]:
        d *= s
    spatial = d // c

    sub, lane = _factor_lanes(d)
    b = _pick_block_batch(n, d)
    grid = (n // b,)

    x3 = x.reshape(n, sub, lane)
    itemsize = jnp.dtype(x.dtype).itemsize

    inv_n = 1.0 / d
    inv_nm1 = 1.0 / max(d - 1, 1)

    # VMEM budget: double-buffered in/out blocks + f32 temporaries + params.
    block_elems = b * d
    vmem_limit_bytes = int(min(
        48 * 2 ** 20,
        max(4 * 2 ** 20,
            4 * block_elems * itemsize + 8 * block_elems * 4 + 4 * d * 4
            + (2 << 20))))

    cost = pl.CostEstimate(
        flops=6 * n * d,
        transcendentals=2 * n,
        bytes_accessed=2 * n * d * itemsize + (2 * d * 4 if affine else 0),
    )
    cparams = pltpu.CompilerParams(
        dimension_semantics=("parallel",),
        vmem_limit_bytes=vmem_limit_bytes,
    )

    x_spec = pl.BlockSpec((b, sub, lane), lambda i: (i, 0, 0))
    out_spec = pl.BlockSpec((b, sub, lane), lambda i: (i, 0, 0))

    if affine:
        # Pre-broadcast per-channel params to the flattened per-sample layout
        # (done once in the wrapper; stays resident across the whole grid).
        g_full = jnp.broadcast_to(
            gamma.reshape(c, 1), (c, spatial)).reshape(sub, lane)
        b_full = jnp.broadcast_to(
            beta.reshape(c, 1), (c, spatial)).reshape(sub, lane)
        kernel = functools.partial(
            _ln_affine_kernel, eps=eps, inv_n=inv_n, inv_nm1=inv_nm1)
        param_spec = pl.BlockSpec((sub, lane), lambda i: (0, 0))
        out3 = pl.pallas_call(
            kernel,
            out_shape=jax.ShapeDtypeStruct((n, sub, lane), x.dtype),
            grid_spec=pltpu.PrefetchScalarGridSpec(
                num_scalar_prefetch=0,
                grid=grid,
                in_specs=[x_spec, param_spec, param_spec],
                out_specs=out_spec,
            ),
            compiler_params=cparams,
            cost_estimate=cost,
        )(x3, g_full, b_full)
    else:
        kernel = functools.partial(
            _ln_noaffine_kernel, eps=eps, inv_n=inv_n, inv_nm1=inv_nm1)
        out3 = pl.pallas_call(
            kernel,
            out_shape=jax.ShapeDtypeStruct((n, sub, lane), x.dtype),
            grid_spec=pltpu.PrefetchScalarGridSpec(
                num_scalar_prefetch=0,
                grid=grid,
                in_specs=[x_spec],
                out_specs=out_spec,
            ),
            compiler_params=cparams,
            cost_estimate=cost,
        )(x3)

    return out3.reshape(orig_shape)


def layer_norm_ref(x, gamma=None, beta=None, eps=1e-5, affine=True):
    # Pure-JAX reference mirroring the PyTorch forward:
    #   mean/std over all non-batch dims, unbiased std, (x-mean)/(std+eps).
    n = x.shape[0]
    flat = x.reshape(n, -1).astype(jnp.float32)
    bshape = (n,) + (1,) * (x.ndim - 1)
    mean = flat.mean(axis=1).reshape(bshape)
    std = jnp.sqrt(flat.var(axis=1, ddof=1)).reshape(bshape)
    y = (x.astype(jnp.float32) - mean) / (std + eps)
    if affine:
        pshape = (1, -1) + (1,) * (x.ndim - 2)
        y = gamma.reshape(pshape) * y + beta.reshape(pshape)
    return y.astype(x.dtype)


if __name__ == "__main__":
    key = jax.random.PRNGKey(0)
    kx, kg = jax.random.split(key)

    N, C, H, W = 2, 4, 16, 16
    x = jax.random.normal(kx, (N, C, H, W), dtype=jnp.float32)

    # Parameters matching the module's __init__: gamma ~ uniform_(), beta = 0.
    gamma = jax.random.uniform(kg, (C,), dtype=jnp.float32)
    beta = jnp.zeros((C,), dtype=jnp.float32)

    out = layer_norm(x, gamma, beta, eps=1e-5, affine=True)
    out = jax.block_until_ready(out)

    ref = layer_norm_ref(x, gamma, beta, eps=1e-5, affine=True)
    assert out.shape == ref.shape
    err = jnp.max(jnp.abs(out.astype(jnp.float32) - ref.astype(jnp.float32)))
    assert jnp.allclose(out, ref, atol=1e-4, rtol=1e-4), f"max abs err {err}"

    print("KERNEL_OK")
</pallas_src>

<mosaic_0001>
module attributes {stable_mosaic.version = 11 : i64} {
  func.func @_ln_affine_kernel(%arg0: i32, %arg1: memref<1x8x128xf32, #tpu.memory_space<vmem>>, %arg2: memref<8x128xf32, #tpu.memory_space<vmem>>, %arg3: memref<8x128xf32, #tpu.memory_space<vmem>>, %arg4: memref<1x8x128xf32, #tpu.memory_space<vmem>>) attributes {dimension_semantics = [#tpu.dimension_semantics<parallel>], iteration_bounds = array<i64: 2>, scalar_prefetch = 0 : i64, scratch_operands = 0 : i64, tpu.core_type = #tpu.core_type<tc>, window_params = [{transform_indices = @transform_0, window_bounds = array<i64: 1, 8, 128>}, {pipeline_mode = #tpu.pipeline_mode<synchronous>, transform_indices = @transform_1, window_bounds = array<i64: 8, 128>}, {pipeline_mode = #tpu.pipeline_mode<synchronous>, transform_indices = @transform_2, window_bounds = array<i64: 8, 128>}, {transform_indices = @transform_3, window_bounds = array<i64: 1, 8, 128>}]} {
    %c0 = arith.constant 0 : index
    %c0_0 = arith.constant 0 : index
    %c0_1 = arith.constant 0 : index
    %0 = vector.load %arg1[%c0, %c0_0, %c0_1] : memref<1x8x128xf32, #tpu.memory_space<vmem>>, vector<1x8x128xf32>
    %cst = arith.constant dense<0.000000e+00> : vector<1xf32>
    %1 = vector.multi_reduction <add>, %0, %cst [1, 2] : vector<1x8x128xf32> to vector<1xf32>
    %2 = vector.shape_cast %1 : vector<1xf32> to vector<1x1x1xf32>
    %3 = arith.mulf %0, %0 : vector<1x8x128xf32>
    %cst_2 = arith.constant dense<0.000000e+00> : vector<1xf32>
    %4 = vector.multi_reduction <add>, %3, %cst_2 [1, 2] : vector<1x8x128xf32> to vector<1xf32>
    %5 = vector.shape_cast %4 : vector<1xf32> to vector<1x1x1xf32>
    %cst_3 = arith.constant 9.765625E-4 : f32
    %6 = vector.broadcast %cst_3 : f32 to vector<1x1x1xf32>
    %7 = arith.mulf %2, %6 : vector<1x1x1xf32>
    %8 = arith.mulf %7, %2 : vector<1x1x1xf32>
    %9 = arith.subf %5, %8 : vector<1x1x1xf32>
    %cst_4 = arith.constant 9.77517105E-4 : f32
    %10 = vector.broadcast %cst_4 : f32 to vector<1x1x1xf32>
    %11 = arith.mulf %9, %10 : vector<1x1x1xf32>
    %12 = math.sqrt %11 : vector<1x1x1xf32>
    %cst_5 = arith.constant 9.99999974E-6 : f32
    %13 = vector.broadcast %cst_5 : f32 to vector<1x1x1xf32>
    %14 = arith.addf %12, %13 : vector<1x1x1xf32>
    %15 = tpu.reciprocal %14 {approx = true} : vector<1x1x1xf32> -> vector<1x1x1xf32>
    %16 = arith.mulf %14, %15 : vector<1x1x1xf32>
    %cst_6 = arith.constant 2.000000e+00 : f32
    %17 = vector.broadcast %cst_6 : f32 to vector<1x1x1xf32>
    %18 = arith.subf %17, %16 : vector<1x1x1xf32>
    %19 = arith.mulf %15, %18 : vector<1x1x1xf32>
    %c0_7 = arith.constant 0 : index
    %c0_8 = arith.constant 0 : index
    %20 = vector.load %arg2[%c0_7, %c0_8] : memref<8x128xf32, #tpu.memory_space<vmem>>, vector<8x128xf32>
    %21 = vector.shape_cast %20 : vector<8x128xf32> to vector<1x8x128xf32>
    %22 = vector.broadcast %19 : vector<1x1x1xf32> to vector<1x8x128xf32>
    %23 = arith.mulf %21, %22 : vector<1x8x128xf32>
    %c0_9 = arith.constant 0 : index
    %c0_10 = arith.constant 0 : index
    %24 = vector.load %arg3[%c0_9, %c0_10] : memref<8x128xf32, #tpu.memory_space<vmem>>, vector<8x128xf32>
    %25 = vector.broadcast %7 : vector<1x1x1xf32> to vector<1x8x128xf32>
    %26 = arith.mulf %25, %23 : vector<1x8x128xf32>
    %27 = vector.shape_cast %24 : vector<8x128xf32> to vector<1x8x128xf32>
    %28 = arith.subf %27, %26 : vector<1x8x128xf32>
    %29 = arith.mulf %0, %23 : vector<1x8x128xf32>
    %30 = arith.addf %29, %28 : vector<1x8x128xf32>
    %c0_11 = arith.constant 0 : index
    %c0_12 = arith.constant 0 : index
    %c0_13 = arith.constant 0 : index
    %31 = vector.load %arg4[%c0_11, %c0_12, %c0_13] : memref<1x8x128xf32, #tpu.memory_space<vmem>>, vector<1x8x128xf32>
    tpu.vector_store %arg4[%c0_11, %c0_12, %c0_13], %30 {strides = array<i32>} : memref<1x8x128xf32, #tpu.memory_space<vmem>>, vector<1x8x128xf32>,
    return
  }
  func.func @transform_0(%arg0: i32) -> (i32, i32, i32) {
    %c0_i32 = arith.constant 0 : i32
    %c0_i32_0 = arith.constant 0 : i32
    %c0_i32_1 = arith.constant 0 : i32
    return %arg0, %c0_i32, %c0_i32_0 : i32, i32, i32
  }
  func.func @transform_1(%arg0: i32) -> (i32, i32) {
    %c0_i32 = arith.constant 0 : i32
    %c0_i32_0 = arith.constant 0 : i32
    %c0_i32_1 = arith.constant 0 : i32
    return %c0_i32, %c0_i32_0 : i32, i32
  }
  func.func @transform_2(%arg0: i32) -> (i32, i32) {
    %c0_i32 = arith.constant 0 : i32
    %c0_i32_0 = arith.constant 0 : i32
    %c0_i32_1 = arith.constant 0 : i32
    return %c0_i32, %c0_i32_0 : i32, i32
  }
  func.func @transform_3(%arg0: i32) -> (i32, i32, i32) {
    %c0_i32 = arith.constant 0 : i32
    %c0_i32_0 = arith.constant 0 : i32
    %c0_i32_1 = arith.constant 0 : i32
    return %arg0, %c0_i32, %c0_i32_0 : i32, i32, i32
  }
}

</mosaic_0001>

<llo_original>
// kernel: tpu_custom_call.1
$region0: #{tpu_custom_call.1}
  #allocation0 [shape = 'u32[]', space=smem, size = 0x4, offset = 0x4, fixed_abs, tag = 'smem constant byte address 0x4 - core index']
  #allocation1 [shape = 'u32[144,128]{1,0:T(1,128)}', space=vmem, size = 0x12000, scoped, tag = 'internal scratch']
  %s0 = inlined_call_operand.hbm [shape: f32[2,8,128], index: 0, kind: input, shape index: {}]
  %s1 = inlined_call_operand.hbm [shape: f32[8,128], index: 1, kind: input, shape index: {}]
  %s2 = inlined_call_operand.hbm [shape: f32[8,128], index: 2, kind: input, shape index: {}]
  %s3 = inlined_call_operand.hbm [shape: f32[2,8,128], index: 3, kind: output, shape index: {}]
  %s4 = sld [smem:[#allocation0]]
  $region57: #{tpu_custom_call.1} parent=0
    _
  %s6 = ssub.s32 1, %s4
  %s7 = scalar_select 0, %s6, %s4
  $region1: #{tpu_custom_call.1} parent=0
    #allocation2 [shape = 'u8[8192]{0}', space=vmem, size = 0x2000, scoped, tag = 'input window, operand 0']
    #allocation3 [shape = 's32[2]{0}', space=sflag, size = 0x8, scoped, tag = 'scoped memory for tpu_custom_call.1']
    #allocation4 [shape = 's32[2]{0}', space=sflag, size = 0x8, scoped, tag = 'scoped memory for tpu_custom_call.1']
    #allocation5 [shape = 'u8[4096]{0}', space=vmem, size = 0x1000, scoped, tag = 'input window, operand 1, single buffered']
    #allocation6 [shape = 's32[1]{0}', space=sflag, size = 0x4, scoped, tag = 'scoped memory for tpu_custom_call.1']
    #allocation7 [shape = 'u8[4096]{0}', space=vmem, size = 0x1000, scoped, tag = 'input window, operand 2, single buffered']
    #allocation8 [shape = 'u8[8192]{0}', space=vmem, size = 0x2000, scoped, tag = 'output window, operand 0']
    %8 = vsyncpa [#allocation3], 0
    %s9 = scalar_lea.sflag [#allocation3], 1
    %10 = vsyncpa %s9, 0
    %11 = vsyncpa [#allocation6], 0
    %12 = vsyncpa [#allocation4], 0
    %s13 = scalar_lea.sflag [#allocation4], 1
    %14 = vsyncpa %s13, 0
    loop: start=0, step=1, limit=4
    $region2: #{tpu_custom_call.1} parent=1 // loop_pre_header
      _
    $region3: #{tpu_custom_call.1} parent=1 // loop_header
      %s16 = sphi 0, %s20
      %p17 = scmp.ge.s32.totalorder %s16, 4
      %s26 = sphi 0, %s28
      %s29 = sphi 0, %s26
      %s30 = sphi 0, %s29
      %s46 = sphi 0, %s30
      %s50 = sphi 0, %s50
      %s52 = sphi 0, %s50
      %s53 = sphi 0, %s52
      %s67 = sphi 0, %s53
      %s71 = sphi 0, %s71
      %s73 = sphi 0, %s71
      %s74 = sphi 0, %s73
      %s88 = sphi 0, %s74
      %s94 = sphi 0, %s96
      %s97 = sphi 0, %s94
      %s98 = sphi 0, %s97
      %s114 = sphi 0, %s98
    $region4: #{tpu_custom_call.1} parent=1 // loop_header_branch
      %19 = sbr.rel (%p17) target = $region8
    $region5: #{tpu_custom_call.1} parent=1 // loop_body
      %s21 = ssub.s32 %s16, 1
      %s22 = ssub.s32 %s16, 2
      %s23 = sadd.s32 %s16, 1
      %s24 = ssub.s32 %s16, %s23
      %p25 = scmp.eq.s32.totalorder %s24, 0
      %s27 = sadd.s32 %s26, 1
      %s28 = scalar_select %p25, %s26, %s27
      %p31 = pneg %p25
      %p32 = scmp.eq.s32.totalorder %s16, 1
      %p33 = por %p31, %p32
      %p34 = scmp.ne.s32.totalorder %s26, %s29
      %p35 = scmp.eq.s32.totalorder %s16, 0
      %p36 = por %p34, %p35
      %p37 = scmp.ne.s32.totalorder %s26, %s29
      %p38 = scmp.eq.s32.totalorder %s21, 1
      %p39 = por %p37, %p38
      %p40 = scmp.ne.s32.totalorder %s29, %s30
      %p41 = scmp.eq.s32.totalorder %s21, 0
      %p42 = por %p40, %p41
      %p43 = scmp.ne.s32.totalorder %s29, %s30
      %p44 = scmp.eq.s32.totalorder %s22, 1
      %p45 = por %p43, %p44
      %p47 = scmp.ne.s32.totalorder %s30, %s46
      %p48 = scmp.eq.s32.totalorder %s22, 0
      %p49 = por %p47, %p48
      %s51 = sadd.s32 %s50, 1
      %p54 = scmp.eq.s32.totalorder %s16, 1
      %p55 = scmp.ne.s32.totalorder %s50, %s52
      %p56 = scmp.eq.s32.totalorder %s16, 0
      %p57 = por %p55, %p56
      %p58 = scmp.ne.s32.totalorder %s50, %s52
      %p59 = scmp.eq.s32.totalorder %s21, 1
      %p60 = por %p58, %p59
      %p61 = scmp.ne.s32.totalorder %s52, %s53
      %p62 = scmp.eq.s32.totalorder %s21, 0
      %p63 = por %p61, %p62
      %p64 = scmp.ne.s32.totalorder %s52, %s53
      %p65 = scmp.eq.s32.totalorder %s22, 1
      %p66 = por %p64, %p65
      %p68 = scmp.ne.s32.totalorder %s53, %s67
      %p69 = scmp.eq.s32.totalorder %s22, 0
      %p70 = por %p68, %p69
      %s72 = sadd.s32 %s71, 1
      %p75 = scmp.eq.s32.totalorder %s16, 1
      %p76 = scmp.ne.s32.totalorder %s71, %s73
      %p77 = scmp.eq.s32.totalorder %s16, 0
      %p78 = por %p76, %p77
      %p79 = scmp.ne.s32.totalorder %s71, %s73
      %p80 = scmp.eq.s32.totalorder %s21, 1
      %p81 = por %p79, %p80
      %p82 = scmp.ne.s32.totalorder %s73, %s74
      %p83 = scmp.eq.s32.totalorder %s21, 0
      %p84 = por %p82, %p83
      %p85 = scmp.ne.s32.totalorder %s73, %s74
      %p86 = scmp.eq.s32.totalorder %s22, 1
      %p87 = por %p85, %p86
      %p89 = scmp.ne.s32.totalorder %s74, %s88
      %p90 = scmp.eq.s32.totalorder %s22, 0
      %p91 = por %p89, %p90
      %s92 = ssub.s32 %s16, %s23
      %p93 = scmp.eq.s32.totalorder %s92, 0
      %s95 = sadd.s32 %s94, 1
      %s96 = scalar_select %p93, %s94, %s95
      %p99 = pneg %p93
      %p100 = scmp.eq.s32.totalorder %s16, 1
      %p101 = por %p99, %p100
      %p102 = scmp.ne.s32.totalorder %s94, %s97
      %p103 = scmp.eq.s32.totalorder %s16, 0
      %p104 = por %p102, %p103
      %p105 = scmp.ne.s32.totalorder %s94, %s97
      %p106 = scmp.eq.s32.totalorder %s21, 1
      %p107 = por %p105, %p106
      %p108 = scmp.ne.s32.totalorder %s97, %s98
      %p109 = scmp.eq.s32.totalorder %s21, 0
      %p110 = por %p108, %p109
      %p111 = scmp.ne.s32.totalorder %s97, %s98
      %p112 = scmp.eq.s32.totalorder %s22, 1
      %p113 = por %p111, %p112
      %p115 = scmp.ne.s32.totalorder %s98, %s114
      %p116 = scmp.eq.s32.totalorder %s22, 0
      %p117 = por %p115, %p116
      %p118 = scmp.le.s32.totalorder 1, %s16
      %p119 = scmp.lt.s32.totalorder %s16, 3
      %p120 = pnand %p118, %p119
      %p121 = pneg %p120
      // Predicated region
      $region9: #{tpu_custom_call.1} parent=5 // pred_check
        _
      $region10: #{tpu_custom_call.1} parent=5 // pred_check_branch
        %123 = sbr.rel (%p120) target = $region12
      $region11: #{tpu_custom_call.1} parent=5 // pred_region
        %s124 = ssub.s32 %s16, 1
        // Predicated region
        $region13: #{tpu_custom_call.1} parent=11 // pred_check
          %p125 = pneg %p63
        $region14: #{tpu_custom_call.1} parent=11 // pred_check_branch
          %127 = sbr.rel (%p125) target = $region16
        $region15: #{tpu_custom_call.1} parent=11 // pred_region
          %s129 = ssub.s32 128, 128
          %130 = vsyncadd [#allocation6], %s129
          %s132 = sshll.u32 [#allocation5], 4
          %s133 = int_to_ptr.vmem [resolvable:$true] %s132
          %135 = dma.hbm_to_vmem [thread:$0]  %s1, 128, %s133, [#allocation6]
        $region16: #{tpu_custom_call.1} parent=11 // pred_fallthru
          _
        // Predicated region
        $region17: #{tpu_custom_call.1} parent=11 // pred_check
          %p136 = pneg %p84
        $region18: #{tpu_custom_call.1} parent=11 // pred_check_branch
          %138 = sbr.rel (%p136) target = $region20
        $region19: #{tpu_custom_call.1} parent=11 // pred_region
          %s140 = ssub.s32 128, 128
          %141 = vsyncadd [#allocation6], %s140
          %s143 = sshll.u32 [#allocation7], 4
          %s144 = int_to_ptr.vmem [resolvable:$true] %s143
          %146 = dma.hbm_to_vmem [thread:$0]  %s2, 128, %s144, [#allocation6]
        $region20: #{tpu_custom_call.1} parent=11 // pred_fallthru
          _
      $region12: #{tpu_custom_call.1} parent=5 // pred_fallthru
        _
      %p147 = scmp.lt.s32.totalorder %s16, 2
      // Predicated region
      $region21: #{tpu_custom_call.1} parent=5 // pred_check
        %p148 = pneg %p147
      $region22: #{tpu_custom_call.1} parent=5 // pred_check_branch
        %150 = sbr.rel (%p148) target = $region24
      $region23: #{tpu_custom_call.1} parent=5 // pred_region
        // Predicated region
        $region25: #{tpu_custom_call.1} parent=23 // pred_check
          %p151 = pneg %p36
        $region26: #{tpu_custom_call.1} parent=23 // pred_check_branch
          %153 = sbr.rel (%p151) target = $region28
        $region27: #{tpu_custom_call.1} parent=23 // pred_region
          %s154 = sand.u32 %s26, 1
          %s155 = scalar_lea.sflag [#allocation3], %s154
          %s156 = sand.u32 %s26, 1
          %s157 = smul.addr %s156, 8
          %s158 = scalar_lea.vmem [#allocation2], %s157
          %s160 = ssub.s32 128, 128
          %161 = vsyncadd %s155, %s160
          %s162 = smul.addr %s16, 128
          %s163 = scalar_lea.hbm %s0, %s162
          %s165 = sshll.u32 %s158, 4
          %s166 = int_to_ptr.vmem [resolvable:$true] %s165
          %168 = dma.hbm_to_vmem [thread:$0]  %s163, 128, %s166, %s155
        $region28: #{tpu_custom_call.1} parent=23 // pred_fallthru
          _
      $region24: #{tpu_custom_call.1} parent=5 // pred_fallthru
        _
      %p169 = scmp.le.s32.totalorder 1, %s16
      %p170 = scmp.lt.s32.totalorder %s16, 3
      %p171 = pnand %p169, %p170
      %p172 = pneg %p171
      // Predicated region
      $region29: #{tpu_custom_call.1} parent=5 // pred_check
        _
      $region30: #{tpu_custom_call.1} parent=5 // pred_check_branch
        %174 = sbr.rel (%p171) target = $region32
      $region31: #{tpu_custom_call.1} parent=5 // pred_region
        %s175 = ssub.s32 %s16, 1
        %s176 = sand.u32 %s29, 1
        %s177 = scalar_lea.sflag [#allocation3], %s176
        %s178 = sand.u32 %s29, 1
        %s179 = smul.addr %s178, 8
        %s180 = scalar_lea.vmem [#allocation2], %s179
        // Predicated region
        $region33: #{tpu_custom_call.1} parent=31 // pred_check
          %p181 = pneg %p42
        $region34: #{tpu_custom_call.1} parent=31 // pred_check_branch
          %183 = sbr.rel (%p181) target = $region36
        $region35: #{tpu_custom_call.1} parent=31 // pred_region
          %184 = dma.done %s177, 128
        $region36: #{tpu_custom_call.1} parent=31 // pred_fallthru
          _
        // Predicated region
        $region37: #{tpu_custom_call.1} parent=31 // pred_check
          %p185 = pneg %p63
        $region38: #{tpu_custom_call.1} parent=31 // pred_check_branch
          %187 = sbr.rel (%p185) target = $region40
        $region39: #{tpu_custom_call.1} parent=31 // pred_region
          %188 = dma.done [#allocation6], 128
        $region40: #{tpu_custom_call.1} parent=31 // pred_fallthru
          _
        // Predicated region
        $region41: #{tpu_custom_call.1} parent=31 // pred_check
          %p189 = pneg %p84
        $region42: #{tpu_custom_call.1} parent=31 // pred_check_branch
          %191 = sbr.rel (%p189) target = $region44
        $region43: #{tpu_custom_call.1} parent=31 // pred_region
          %192 = dma.done [#allocation6], 128
        $region44: #{tpu_custom_call.1} parent=31 // pred_fallthru
          _
        %s193 = sand.u32 %s29, 1
        %s194 = scalar_lea.sflag [#allocation3], %s193
        %s195 = sand.u32 %s29, 1
        %s196 = smul.addr %s195, 8
        %s197 = scalar_lea.vmem [#allocation2], %s196
        %p198 = pneg %p42
        %p199 = pneg %p39
        %p200 = pneg %p63
        %p201 = pneg %p60
        %p202 = pneg %p84
        %p203 = pneg %p81
        %p204 = pneg %p110
        %p205 = pneg %p107
        %s206 = sand.u32 %s97, 1
        %s207 = scalar_lea.sflag [#allocation4], %s206
        %s208 = sand.u32 %s97, 1
        %s209 = smul.addr %s208, 8
        %s210 = scalar_lea.vmem [#allocation8], %s209
        %v211 = vld [vmem:[%s180] sm:$0xff]
        %212 = vadd.xlane.f32.xlu0 %v211
        %v213 = vpop.xlane.xlu0 %212
        %v214 = vrot.slane %v213, 4
        %v215 = vadd.f32 %v213, %v214
        %v216 = vrot.slane %v215, 2
        %v217 = vadd.f32 %v215, %v216
        %v218 = vrot.slane %v217, 1
        %v219 = vadd.f32 %v217, %v218
        %v220 = vmul.f32 %v211, %v211
        %221 = vadd.xlane.f32.xlu0 %v220
        %v222 = vpop.xlane.xlu0 %221
        %v223 = vrot.slane %v222, 4
        %v224 = vadd.f32 %v222, %v223
        %v225 = vrot.slane %v224, 2
        %v226 = vadd.f32 %v224, %v225
        %v227 = vrot.slane %v226, 1
        %v228 = vadd.f32 %v226, %v227
        %v229 = vmul.f32 %v219, 0.0009765625
        %v230 = vmul.f32 %v229, %v219
        %v231 = vsub.f32 %v228, %v230
        %v232 = vmul.f32 %v231, 0.0009775171
        %v233 = vrsqrt.pop %v232
        %v234 = vmul.f32 %v232, %v233
        %vm235 = vcmp.eq.f32.partialorder %v232, inf
        %v236 = vsel %vm235, %v232, %v234
        %vm237 = vcmp.eq.f32.partialorder %v232, 0.0
        %v238 = vand.u32 %v232, 2147483648
        %v239 = vsel %vm237, %v238, %v236
        %v240 = vadd.f32 %v239, 1e-05
        %v241 = vrcp.pop %v240
        %v242 = vmul.f32 %v240, %v241
        %v243 = vsub.f32 2.0, %v242
        %v244 = vmul.f32 %v241, %v243
        %v245 = vld [vmem:[#allocation5] sm:$0xff]
        %v246 = vmul.f32 %v245, %v244
        %v247 = vld [vmem:[#allocation7] sm:$0xff]
        %v248 = vmul.f32 %v229, %v246
        %v249 = vsub.f32 %v247, %v248
        %v250 = vmul.f32 %v211, %v246
        %v251 = vadd.f32 %v250, %v249
        %252 = vst [vmem:[%s210] sm:$0xff] %v251
        %s253 = sand.u32 %s97, 1
        %s254 = scalar_lea.sflag [#allocation4], %s253
        %s255 = sand.u32 %s97, 1
        %s256 = smul.addr %s255, 8
        %s257 = scalar_lea.vmem [#allocation8], %s256
        // Predicated region
        $region45: #{tpu_custom_call.1} parent=31 // pred_check
          %p258 = pneg %p107
        $region46: #{tpu_custom_call.1} parent=31 // pred_check_branch
          %260 = sbr.rel (%p258) target = $region48
        $region47: #{tpu_custom_call.1} parent=31 // pred_region
          %s262 = ssub.s32 128, 128
          %263 = vsyncadd %s254, %s262
          %s264 = smul.addr %s21, 128
          %s265 = scalar_lea.hbm %s3, %s264
          %s267 = sshll.u32 %s257, 4
          %s268 = int_to_ptr.vmem [resolvable:$true] %s267
          %270 = dma.vmem_to_hbm [thread:$0]  %s268, 128, %s265, %s254
        $region48: #{tpu_custom_call.1} parent=31 // pred_fallthru
          _
      $region32: #{tpu_custom_call.1} parent=5 // pred_fallthru
        _
      %p271 = scmp.le.s32.totalorder 2, %s16
      // Predicated region
      $region49: #{tpu_custom_call.1} parent=5 // pred_check
        %p272 = pneg %p271
      $region50: #{tpu_custom_call.1} parent=5 // pred_check_branch
        %274 = sbr.rel (%p272) target = $region52
      $region51: #{tpu_custom_call.1} parent=5 // pred_region
        %s275 = ssub.s32 %s16, 2
        // Predicated region
        $region53: #{tpu_custom_call.1} parent=51 // pred_check
          %p276 = pneg %p113
        $region54: #{tpu_custom_call.1} parent=51 // pred_check_branch
          %278 = sbr.rel (%p276) target = $region56
        $region55: #{tpu_custom_call.1} parent=51 // pred_region
          %s279 = sand.u32 %s98, 1
          %s280 = scalar_lea.sflag [#allocation4], %s279
          %s281 = sand.u32 %s98, 1
          %s282 = smul.addr %s281, 8
          %s283 = scalar_lea.vmem [#allocation8], %s282
          %284 = dma.done %s280, 128
        $region56: #{tpu_custom_call.1} parent=51 // pred_fallthru
          _
      $region52: #{tpu_custom_call.1} parent=5 // pred_fallthru
        _
    $region6: #{tpu_custom_call.1} parent=1 // loop_footer
      %s20 = sadd.s32 1, %s16
    $region7: #{tpu_custom_call.1} parent=1 // loop_footer_branch
      %15 = sbr.rel target = $region3
    $region8: #{tpu_custom_call.1} parent=1 // loop_exit
      _
    %285 = vsyncpa [#allocation3], 1
    %s286 = scalar_lea.sflag [#allocation3], 1
    %287 = vsyncpa %s286, 1
    %288 = vsyncpa [#allocation6], 1
    %289 = vsyncpa [#allocation4], 1
    %s290 = scalar_lea.sflag [#allocation4], 1
    %291 = vsyncpa %s290, 1

</llo_original>
